<compile_context>
chip_gen: v7x
topology: tpu7x:2x2x1
jax: 0.10.0
libtpu: 0.0.40
codegen_flags: <defaults>
</compile_context>

<pallas_src>
import jax
import jax.numpy as jnp
from jax.experimental import pallas as pl
from jax.experimental.pallas import tpu as pltpu

PART = 6
BN_EPS = 1e-5


def _rpp_kernel(x_ref, wconv_ref, scale_ref, shift_ref, out_ref):
    # x_ref:     (1, C, S)  one sample; channels on sublanes, spatial on lanes
    #            (natural NCHW layout -> no HBM transpose of x in the wrapper)
    # wconv_ref: (P, C)     1x1-conv weight
    # scale_ref: (C, 1)     folded BN scale = gamma / sqrt(var + eps)
    # shift_ref: (C, 1)     folded BN shift = beta - mean * scale
    # out_ref:   (1, C, P)  pooled part features
    x = x_ref[0]                                   # (C, S)
    C, S = x.shape

    # 1x1 conv over channels -> part logits on the MXU: (P,C)@(C,S) -> (P,S).
    logits = jnp.dot(wconv_ref[...], x, preferred_element_type=jnp.float32)

    # Softmax over the 6 parts (sublane axis).  This is a tiny (P, S) op, so an
    # exact divide is used to stay inside the 1e-5 correctness check;
    # pl.reciprocal(..., approx=True) could replace it when tolerance allows.
    m = jnp.max(logits, axis=0, keepdims=True)     # (1, S)
    e = jnp.exp(logits - m)                        # (P, S)
    p = e / jnp.sum(e, axis=0, keepdims=True)      # (P, S)

    # BatchNorm (eval) as a per-channel affine; scale multiply and shift
    # broadcast hoisted out of the 6-part loop (JAX does not CSE broadcasts).
    xs = x * scale_ref[...]                        # (C, S), one multiply total
    shift_b = jnp.broadcast_to(shift_ref[...], xs.shape)

    inv_s = 1.0 / S
    eye = jnp.eye(PART, dtype=jnp.float32)         # (P, P) one-hot rows
    pooled = jnp.zeros((C, PART), dtype=jnp.float32)
    for i in range(PART):  # static unroll, PART == 6
        # p row (1, S) -> (C, S): stride-0 sublane broadcast (near free).
        y = jnp.maximum(xs * p[i : i + 1, :] + shift_b, 0.0)   # BN + ReLU
        col = jnp.sum(y, axis=1, keepdims=True)                # (C, 1) pool numerator
        pooled = pooled + col * eye[i : i + 1, :]              # place into column i
    out_ref[0] = pooled * inv_s                                # single (C, P) store


def rpp_forward(x_nchw, conv_w, gamma, beta, running_mean, running_var):
    """x_nchw: (N, C, H, W) float32. conv_w: (P, C, 1, 1). Returns (N, C, P, 1)."""
    N, C, H, W = x_nchw.shape
    S = H * W
    P = conv_w.shape[0]

    # NCHW -> (N, C, S): a free reshape, no HBM round-trip for a transpose.
    x_ncs = x_nchw.reshape(N, C, S)
    wconv = conv_w.reshape(P, C)

    # Fold BatchNorm2d (inference) into scale/shift once, outside the kernel.
    scale = gamma * jax.lax.rsqrt(running_var + BN_EPS)
    shift = beta - running_mean * scale
    scale2 = scale.reshape(C, 1)
    shift2 = shift.reshape(C, 1)

    out = pl.pallas_call(
        _rpp_kernel,
        out_shape=jax.ShapeDtypeStruct((N, C, P), jnp.float32),
        grid_spec=pltpu.PrefetchScalarGridSpec(
            num_scalar_prefetch=0,
            grid=(N,),
            in_specs=[
                pl.BlockSpec((1, C, S), lambda n: (n, 0, 0)),
                pl.BlockSpec((P, C), lambda n: (0, 0)),
                pl.BlockSpec((C, 1), lambda n: (0, 0)),
                pl.BlockSpec((C, 1), lambda n: (0, 0)),
            ],
            out_specs=pl.BlockSpec((1, C, P), lambda n: (n, 0, 0)),
        ),
        compiler_params=pltpu.CompilerParams(
            dimension_semantics=("parallel",),  # batch shards across the 2 TCs on v7x
        ),
    )(x_ncs, wconv, scale2, shift2)

    # (N, C, P) -> (N, C, P, 1) to match torch.cat(y, 2); just adds an axis.
    return out[..., None]


def rpp_reference(x_nchw, conv_w, gamma, beta, running_mean, running_var):
    """Pure-JAX reference mirroring the PyTorch forward."""
    N, C, H, W = x_nchw.shape
    P = conv_w.shape[0]
    w = jnp.einsum("nchw,pc->nphw", x_nchw, conv_w.reshape(P, C))
    p = jax.nn.softmax(w, axis=1)
    scale = gamma / jnp.sqrt(running_var + BN_EPS)
    shift = beta - running_mean * scale
    ys = []
    for i in range(P):
        y_i = x_nchw * p[:, i : i + 1]
        y_i = y_i * scale[None, :, None, None] + shift[None, :, None, None]
        y_i = jnp.maximum(y_i, 0.0)
        y_i = jnp.mean(y_i, axis=(2, 3), keepdims=True)  # (N, C, 1, 1)
        ys.append(y_i)
    return jnp.concatenate(ys, axis=2)  # (N, C, P, 1)


if __name__ == "__main__":
    # Small shapes consistent with the module (full model uses C=1280, 24x8 map).
    N, C, H, W = 2, 128, 6, 4

    key = jax.random.PRNGKey(0)
    kx, kw = jax.random.split(key)

    x = jax.random.normal(kx, (N, C, H, W), dtype=jnp.float32)

    # Conv2d(C, 6, k=1, bias=False) with kaiming_normal_(mode='fan_out', relu):
    # fan_out = out_channels * k*k = 6, std = sqrt(2 / fan_out).
    conv_std = (2.0 / PART) ** 0.5
    conv_w = conv_std * jax.random.normal(kw, (PART, C, 1, 1), dtype=jnp.float32)

    # BatchNorm2d(C) params per weights_init_kaiming / PyTorch defaults.
    gamma = jnp.ones((C,), jnp.float32)
    beta = jnp.zeros((C,), jnp.float32)
    running_mean = jnp.zeros((C,), jnp.float32)
    running_var = jnp.ones((C,), jnp.float32)
    # TODO(synk): training-mode BatchNorm (batch statistics + running-stat
    # updates) is stateful; inference semantics are implemented instead.

    f = rpp_forward(x, conv_w, gamma, beta, running_mean, running_var)
    f = jax.block_until_ready(f)

    ref = rpp_reference(x, conv_w, gamma, beta, running_mean, running_var)
    assert f.shape == (N, C, PART, 1), f.shape
    assert jnp.allclose(f, ref, atol=1e-5, rtol=1e-5), float(jnp.max(jnp.abs(f - ref)))

    print("KERNEL_OK")
</pallas_src>

<mosaic_0001>
module attributes {stable_mosaic.version = 11 : i64} {
  func.func @_rpp_kernel(%arg0: i32, %arg1: memref<1x128x24xf32, #tpu.memory_space<vmem>>, %arg2: memref<6x128xf32, #tpu.memory_space<vmem>>, %arg3: memref<128x1xf32, #tpu.memory_space<vmem>>, %arg4: memref<128x1xf32, #tpu.memory_space<vmem>>, %arg5: memref<1x128x6xf32, #tpu.memory_space<vmem>>) attributes {dimension_semantics = [#tpu.dimension_semantics<parallel>], iteration_bounds = array<i64: 2>, scalar_prefetch = 0 : i64, scratch_operands = 0 : i64, tpu.core_type = #tpu.core_type<tc>, window_params = [{transform_indices = @transform_0, window_bounds = array<i64: 1, 128, 24>}, {pipeline_mode = #tpu.pipeline_mode<synchronous>, transform_indices = @transform_1, window_bounds = array<i64: 6, 128>}, {pipeline_mode = #tpu.pipeline_mode<synchronous>, transform_indices = @transform_2, window_bounds = array<i64: 128, 1>}, {pipeline_mode = #tpu.pipeline_mode<synchronous>, transform_indices = @transform_3, window_bounds = array<i64: 128, 1>}, {transform_indices = @transform_4, window_bounds = array<i64: 1, 128, 6>}]} {
    %c0 = arith.constant 0 : index
    %c0_0 = arith.constant 0 : index
    %c0_1 = arith.constant 0 : index
    %0 = vector.load %arg1[%c0, %c0_0, %c0_1] : memref<1x128x24xf32, #tpu.memory_space<vmem>>, vector<1x128x24xf32>
    %1 = vector.shape_cast %0 : vector<1x128x24xf32> to vector<128x24xf32>
    %c0_2 = arith.constant 0 : index
    %c0_3 = arith.constant 0 : index
    %2 = vector.load %arg2[%c0_2, %c0_3] : memref<6x128xf32, #tpu.memory_space<vmem>>, vector<6x128xf32>
    %cst = arith.constant dense<0.000000e+00> : vector<6x24xf32>
    %3 = tpu.matmul %2, %1, %cst {dimension_numbers = #tpu.dot_dimension_numbers<[1], [0], [0], [1], [0, 0, 1, 1], [], []>} : vector<6x128xf32>, vector<128x24xf32>, vector<6x24xf32> -> vector<6x24xf32>
    %cst_4 = arith.constant dense<0xFF800000> : vector<24xf32>
    %4 = vector.multi_reduction <maximumf>, %3, %cst_4 [0] : vector<6x24xf32> to vector<24xf32>
    %5 = vector.shape_cast %4 : vector<24xf32> to vector<1x24xf32>
    %6 = vector.broadcast %5 : vector<1x24xf32> to vector<6x24xf32>
    %7 = arith.subf %3, %6 : vector<6x24xf32>
    %8 = math.exp %7 : vector<6x24xf32>
    %cst_5 = arith.constant dense<0.000000e+00> : vector<24xf32>
    %9 = vector.multi_reduction <add>, %8, %cst_5 [0] : vector<6x24xf32> to vector<24xf32>
    %10 = vector.shape_cast %9 : vector<24xf32> to vector<1x24xf32>
    %11 = vector.broadcast %10 : vector<1x24xf32> to vector<6x24xf32>
    %12 = arith.divf %8, %11 : vector<6x24xf32>
    %c0_6 = arith.constant 0 : index
    %c0_7 = arith.constant 0 : index
    %13 = vector.load %arg3[%c0_6, %c0_7] : memref<128x1xf32, #tpu.memory_space<vmem>>, vector<128x1xf32>
    %14 = vector.broadcast %13 : vector<128x1xf32> to vector<128x24xf32>
    %15 = arith.mulf %1, %14 : vector<128x24xf32>
    %c0_8 = arith.constant 0 : index
    %c0_9 = arith.constant 0 : index
    %16 = vector.load %arg4[%c0_8, %c0_9] : memref<128x1xf32, #tpu.memory_space<vmem>>, vector<128x1xf32>
    %17 = vector.shape_cast %16 : vector<128x1xf32> to vector<128x1xf32>
    %18 = vector.broadcast %17 : vector<128x1xf32> to vector<128x24xf32>
    %19 = tpu.iota {dimensions = array<i32: 0>} : vector<6x6xi32>
    %20 = tpu.iota {dimensions = array<i32: 1>} : vector<6x6xi32>
    %c0_i32 = arith.constant 0 : i32
    %21 = vector.broadcast %c0_i32 : i32 to vector<6x6xi32>
    %22 = arith.addi %19, %21 : vector<6x6xi32>
    %23 = arith.cmpi eq, %22, %20 : vector<6x6xi32>
    %24 = arith.extui %23 : vector<6x6xi1> to vector<6x6xi32>
    %25 = arith.sitofp %24 : vector<6x6xi32> to vector<6x6xf32>
    %cst_10 = arith.constant 0.000000e+00 : f32
    %26 = vector.broadcast %cst_10 : f32 to vector<128x6xf32>
    %27 = vector.extract_strided_slice %12 {offsets = [0, 0], sizes = [1, 24], strides = [1, 1]} : vector<6x24xf32> to vector<1x24xf32>
    %28 = vector.broadcast %27 : vector<1x24xf32> to vector<128x24xf32>
    %29 = arith.mulf %15, %28 : vector<128x24xf32>
    %30 = arith.addf %29, %18 : vector<128x24xf32>
    %cst_11 = arith.constant 0.000000e+00 : f32
    %31 = vector.broadcast %cst_11 : f32 to vector<128x24xf32>
    %32 = arith.maximumf %30, %31 : vector<128x24xf32>
    %cst_12 = arith.constant dense<0.000000e+00> : vector<128xf32>
    %33 = vector.multi_reduction <add>, %32, %cst_12 [1] : vector<128x24xf32> to vector<128xf32>
    %34 = vector.shape_cast %33 : vector<128xf32> to vector<128x1xf32>
    %35 = vector.extract_strided_slice %25 {offsets = [0, 0], sizes = [1, 6], strides = [1, 1]} : vector<6x6xf32> to vector<1x6xf32>
    %36 = vector.broadcast %34 : vector<128x1xf32> to vector<128x6xf32>
    %37 = vector.broadcast %35 : vector<1x6xf32> to vector<128x6xf32>
    %38 = arith.mulf %36, %37 : vector<128x6xf32>
    %39 = arith.addf %26, %38 : vector<128x6xf32>
    %40 = vector.extract_strided_slice %12 {offsets = [1, 0], sizes = [1, 24], strides = [1, 1]} : vector<6x24xf32> to vector<1x24xf32>
    %41 = vector.broadcast %40 : vector<1x24xf32> to vector<128x24xf32>
    %42 = arith.mulf %15, %41 : vector<128x24xf32>
    %43 = arith.addf %42, %18 : vector<128x24xf32>
    %cst_13 = arith.constant 0.000000e+00 : f32
    %44 = vector.broadcast %cst_13 : f32 to vector<128x24xf32>
    %45 = arith.maximumf %43, %44 : vector<128x24xf32>
    %cst_14 = arith.constant dense<0.000000e+00> : vector<128xf32>
    %46 = vector.multi_reduction <add>, %45, %cst_14 [1] : vector<128x24xf32> to vector<128xf32>
    %47 = vector.shape_cast %46 : vector<128xf32> to vector<128x1xf32>
    %48 = vector.extract_strided_slice %25 {offsets = [1, 0], sizes = [1, 6], strides = [1, 1]} : vector<6x6xf32> to vector<1x6xf32>
    %49 = vector.broadcast %47 : vector<128x1xf32> to vector<128x6xf32>
    %50 = vector.broadcast %48 : vector<1x6xf32> to vector<128x6xf32>
    %51 = arith.mulf %49, %50 : vector<128x6xf32>
    %52 = arith.addf %39, %51 : vector<128x6xf32>
    %53 = vector.extract_strided_slice %12 {offsets = [2, 0], sizes = [1, 24], strides = [1, 1]} : vector<6x24xf32> to vector<1x24xf32>
    %54 = vector.broadcast %53 : vector<1x24xf32> to vector<128x24xf32>
    %55 = arith.mulf %15, %54 : vector<128x24xf32>
    %56 = arith.addf %55, %18 : vector<128x24xf32>
    %cst_15 = arith.constant 0.000000e+00 : f32
    %57 = vector.broadcast %cst_15 : f32 to vector<128x24xf32>
    %58 = arith.maximumf %56, %57 : vector<128x24xf32>
    %cst_16 = arith.constant dense<0.000000e+00> : vector<128xf32>
    %59 = vector.multi_reduction <add>, %58, %cst_16 [1] : vector<128x24xf32> to vector<128xf32>
    %60 = vector.shape_cast %59 : vector<128xf32> to vector<128x1xf32>
    %61 = vector.extract_strided_slice %25 {offsets = [2, 0], sizes = [1, 6], strides = [1, 1]} : vector<6x6xf32> to vector<1x6xf32>
    %62 = vector.broadcast %60 : vector<128x1xf32> to vector<128x6xf32>
    %63 = vector.broadcast %61 : vector<1x6xf32> to vector<128x6xf32>
    %64 = arith.mulf %62, %63 : vector<128x6xf32>
    %65 = arith.addf %52, %64 : vector<128x6xf32>
    %66 = vector.extract_strided_slice %12 {offsets = [3, 0], sizes = [1, 24], strides = [1, 1]} : vector<6x24xf32> to vector<1x24xf32>
    %67 = vector.broadcast %66 : vector<1x24xf32> to vector<128x24xf32>
    %68 = arith.mulf %15, %67 : vector<128x24xf32>
    %69 = arith.addf %68, %18 : vector<128x24xf32>
    %cst_17 = arith.constant 0.000000e+00 : f32
    %70 = vector.broadcast %cst_17 : f32 to vector<128x24xf32>
    %71 = arith.maximumf %69, %70 : vector<128x24xf32>
    %cst_18 = arith.constant dense<0.000000e+00> : vector<128xf32>
    %72 = vector.multi_reduction <add>, %71, %cst_18 [1] : vector<128x24xf32> to vector<128xf32>
    %73 = vector.shape_cast %72 : vector<128xf32> to vector<128x1xf32>
    %74 = vector.extract_strided_slice %25 {offsets = [3, 0], sizes = [1, 6], strides = [1, 1]} : vector<6x6xf32> to vector<1x6xf32>
    %75 = vector.broadcast %73 : vector<128x1xf32> to vector<128x6xf32>
    %76 = vector.broadcast %74 : vector<1x6xf32> to vector<128x6xf32>
    %77 = arith.mulf %75, %76 : vector<128x6xf32>
    %78 = arith.addf %65, %77 : vector<128x6xf32>
    %79 = vector.extract_strided_slice %12 {offsets = [4, 0], sizes = [1, 24], strides = [1, 1]} : vector<6x24xf32> to vector<1x24xf32>
    %80 = vector.broadcast %79 : vector<1x24xf32> to vector<128x24xf32>
    %81 = arith.mulf %15, %80 : vector<128x24xf32>
    %82 = arith.addf %81, %18 : vector<128x24xf32>
    %cst_19 = arith.constant 0.000000e+00 : f32
    %83 = vector.broadcast %cst_19 : f32 to vector<128x24xf32>
    %84 = arith.maximumf %82, %83 : vector<128x24xf32>
    %cst_20 = arith.constant dense<0.000000e+00> : vector<128xf32>
    %85 = vector.multi_reduction <add>, %84, %cst_20 [1] : vector<128x24xf32> to vector<128xf32>
    %86 = vector.shape_cast %85 : vector<128xf32> to vector<128x1xf32>
    %87 = vector.extract_strided_slice %25 {offsets = [4, 0], sizes = [1, 6], strides = [1, 1]} : vector<6x6xf32> to vector<1x6xf32>
    %88 = vector.broadcast %86 : vector<128x1xf32> to vector<128x6xf32>
    %89 = vector.broadcast %87 : vector<1x6xf32> to vector<128x6xf32>
    %90 = arith.mulf %88, %89 : vector<128x6xf32>
    %91 = arith.addf %78, %90 : vector<128x6xf32>
    %92 = vector.extract_strided_slice %12 {offsets = [5, 0], sizes = [1, 24], strides = [1, 1]} : vector<6x24xf32> to vector<1x24xf32>
    %93 = vector.broadcast %92 : vector<1x24xf32> to vector<128x24xf32>
    %94 = arith.mulf %15, %93 : vector<128x24xf32>
    %95 = arith.addf %94, %18 : vector<128x24xf32>
    %cst_21 = arith.constant 0.000000e+00 : f32
    %96 = vector.broadcast %cst_21 : f32 to vector<128x24xf32>
    %97 = arith.maximumf %95, %96 : vector<128x24xf32>
    %cst_22 = arith.constant dense<0.000000e+00> : vector<128xf32>
    %98 = vector.multi_reduction <add>, %97, %cst_22 [1] : vector<128x24xf32> to vector<128xf32>
    %99 = vector.shape_cast %98 : vector<128xf32> to vector<128x1xf32>
    %100 = vector.extract_strided_slice %25 {offsets = [5, 0], sizes = [1, 6], strides = [1, 1]} : vector<6x6xf32> to vector<1x6xf32>
    %101 = vector.broadcast %99 : vector<128x1xf32> to vector<128x6xf32>
    %102 = vector.broadcast %100 : vector<1x6xf32> to vector<128x6xf32>
    %103 = arith.mulf %101, %102 : vector<128x6xf32>
    %104 = arith.addf %91, %103 : vector<128x6xf32>
    %cst_23 = arith.constant 0.0416666679 : f32
    %105 = vector.broadcast %cst_23 : f32 to vector<128x6xf32>
    %106 = arith.mulf %104, %105 : vector<128x6xf32>
    %c0_24 = arith.constant 0 : index
    %c0_25 = arith.constant 0 : index
    %c0_26 = arith.constant 0 : index
    %107 = vector.load %arg5[%c0_24, %c0_25, %c0_26] : memref<1x128x6xf32, #tpu.memory_space<vmem>>, vector<1x128x6xf32>
    %108 = vector.shape_cast %107 : vector<1x128x6xf32> to vector<128x6xf32>
    %109 = vector.shape_cast %106 : vector<128x6xf32> to vector<1x128x6xf32>
    tpu.vector_store %arg5[%c0_24, %c0_25, %c0_26], %109 {strides = array<i32>} : memref<1x128x6xf32, #tpu.memory_space<vmem>>, vector<1x128x6xf32>,
    return
  }
  func.func @transform_0(%arg0: i32) -> (i32, i32, i32) {
    %c0_i32 = arith.constant 0 : i32
    %c0_i32_0 = arith.constant 0 : i32
    %c0_i32_1 = arith.constant 0 : i32
    return %arg0, %c0_i32, %c0_i32_0 : i32, i32, i32
  }
  func.func @transform_1(%arg0: i32) -> (i32, i32) {
    %c0_i32 = arith.constant 0 : i32
    %c0_i32_0 = arith.constant 0 : i32
    %c0_i32_1 = arith.constant 0 : i32
    return %c0_i32, %c0_i32_0 : i32, i32
  }
  func.func @transform_2(%arg0: i32) -> (i32, i32) {
    %c0_i32 = arith.constant 0 : i32
    %c0_i32_0 = arith.constant 0 : i32
    %c0_i32_1 = arith.constant 0 : i32
    return %c0_i32, %c0_i32_0 : i32, i32
  }
  func.func @transform_3(%arg0: i32) -> (i32, i32) {
    %c0_i32 = arith.constant 0 : i32
    %c0_i32_0 = arith.constant 0 : i32
    %c0_i32_1 = arith.constant 0 : i32
    return %c0_i32, %c0_i32_0 : i32, i32
  }
  func.func @transform_4(%arg0: i32) -> (i32, i32, i32) {
    %c0_i32 = arith.constant 0 : i32
    %c0_i32_0 = arith.constant 0 : i32
    %c0_i32_1 = arith.constant 0 : i32
    return %arg0, %c0_i32, %c0_i32_0 : i32, i32, i32
  }
}

</mosaic_0001>

<llo_original>
// kernel: tpu_custom_call.1
$region0: #{tpu_custom_call.1}
  #allocation0 [shape = 'u32[]', space=smem, size = 0x4, offset = 0x4, fixed_abs, tag = 'smem constant byte address 0x4 - core index']
  #allocation1 [shape = 'u32[144,128]{1,0:T(1,128)}', space=vmem, size = 0x12000, scoped, tag = 'internal scratch']
  %s0 = inlined_call_operand.vmem [shape: f32[2,128,24], index: 0, kind: input, shape index: {}]
  %s1 = inlined_call_operand.vmem [shape: f32[6,128], index: 1, kind: input, shape index: {}]
  %s2 = inlined_call_operand.vmem [shape: f32[128,1], index: 2, kind: input, shape index: {}]
  %s3 = inlined_call_operand.vmem [shape: f32[128,1], index: 3, kind: input, shape index: {}]
  %s4 = inlined_call_operand.vmem [shape: f32[2,128,6], index: 4, kind: output, shape index: {}]
  %s5 = sld [smem:[#allocation0]]
  $region49: #{tpu_custom_call.1} parent=0
    _
  %s7 = ssub.s32 1, %s5
  %s8 = scalar_select 0, %s7, %s5
  loop: start=0, step=1, limit=4
  $region2: #{tpu_custom_call.1} parent=0 // loop_pre_header
    _
  $region3: #{tpu_custom_call.1} parent=0 // loop_header
    %s10 = sphi 0, %s14
    %p11 = scmp.ge.s32.totalorder %s10, 4
    %s20 = sphi 0, %s22
    %s23 = sphi 0, %s20
    %s24 = sphi 0, %s23
    %s40 = sphi 0, %s24
    %s44 = sphi 0, %s44
    %s46 = sphi 0, %s44
    %s47 = sphi 0, %s46
    %s61 = sphi 0, %s47
    %s65 = sphi 0, %s65
    %s67 = sphi 0, %s65
    %s68 = sphi 0, %s67
    %s82 = sphi 0, %s68
    %s86 = sphi 0, %s86
    %s88 = sphi 0, %s86
    %s89 = sphi 0, %s88
    %s103 = sphi 0, %s89
    %s109 = sphi 0, %s111
    %s112 = sphi 0, %s109
    %s113 = sphi 0, %s112
    %s129 = sphi 0, %s113
  $region4: #{tpu_custom_call.1} parent=0 // loop_header_branch
    %13 = sbr.rel (%p11) target = $region8
  $region5: #{tpu_custom_call.1} parent=0 // loop_body
    %s15 = ssub.s32 %s10, 1
    %s16 = ssub.s32 %s10, 2
    %s17 = sadd.s32 %s10, 1
    %s18 = ssub.s32 %s10, %s17
    %p19 = scmp.eq.s32.totalorder %s18, 0
    %s21 = sadd.s32 %s20, 1
    %s22 = scalar_select %p19, %s20, %s21
    %p25 = pneg %p19
    %p26 = scmp.eq.s32.totalorder %s10, 1
    %p27 = por %p25, %p26
    %p28 = scmp.ne.s32.totalorder %s20, %s23
    %p29 = scmp.eq.s32.totalorder %s10, 0
    %p30 = por %p28, %p29
    %p31 = scmp.ne.s32.totalorder %s20, %s23
    %p32 = scmp.eq.s32.totalorder %s15, 1
    %p33 = por %p31, %p32
    %p34 = scmp.ne.s32.totalorder %s23, %s24
    %p35 = scmp.eq.s32.totalorder %s15, 0
    %p36 = por %p34, %p35
    %p37 = scmp.ne.s32.totalorder %s23, %s24
    %p38 = scmp.eq.s32.totalorder %s16, 1
    %p39 = por %p37, %p38
    %p41 = scmp.ne.s32.totalorder %s24, %s40
    %p42 = scmp.eq.s32.totalorder %s16, 0
    %p43 = por %p41, %p42
    %s45 = sadd.s32 %s44, 1
    %p48 = scmp.eq.s32.totalorder %s10, 1
    %p49 = scmp.ne.s32.totalorder %s44, %s46
    %p50 = scmp.eq.s32.totalorder %s10, 0
    %p51 = por %p49, %p50
    %p52 = scmp.ne.s32.totalorder %s44, %s46
    %p53 = scmp.eq.s32.totalorder %s15, 1
    %p54 = por %p52, %p53
    %p55 = scmp.ne.s32.totalorder %s46, %s47
    %p56 = scmp.eq.s32.totalorder %s15, 0
    %p57 = por %p55, %p56
    %p58 = scmp.ne.s32.totalorder %s46, %s47
    %p59 = scmp.eq.s32.totalorder %s16, 1
    %p60 = por %p58, %p59
    %p62 = scmp.ne.s32.totalorder %s47, %s61
    %p63 = scmp.eq.s32.totalorder %s16, 0
    %p64 = por %p62, %p63
    %s66 = sadd.s32 %s65, 1
    %p69 = scmp.eq.s32.totalorder %s10, 1
    %p70 = scmp.ne.s32.totalorder %s65, %s67
    %p71 = scmp.eq.s32.totalorder %s10, 0
    %p72 = por %p70, %p71
    %p73 = scmp.ne.s32.totalorder %s65, %s67
    %p74 = scmp.eq.s32.totalorder %s15, 1
    %p75 = por %p73, %p74
    %p76 = scmp.ne.s32.totalorder %s67, %s68
    %p77 = scmp.eq.s32.totalorder %s15, 0
    %p78 = por %p76, %p77
    %p79 = scmp.ne.s32.totalorder %s67, %s68
    %p80 = scmp.eq.s32.totalorder %s16, 1
    %p81 = por %p79, %p80
    %p83 = scmp.ne.s32.totalorder %s68, %s82
    %p84 = scmp.eq.s32.totalorder %s16, 0
    %p85 = por %p83, %p84
    %s87 = sadd.s32 %s86, 1
    %p90 = scmp.eq.s32.totalorder %s10, 1
    %p91 = scmp.ne.s32.totalorder %s86, %s88
    %p92 = scmp.eq.s32.totalorder %s10, 0
    %p93 = por %p91, %p92
    %p94 = scmp.ne.s32.totalorder %s86, %s88
    %p95 = scmp.eq.s32.totalorder %s15, 1
    %p96 = por %p94, %p95
    %p97 = scmp.ne.s32.totalorder %s88, %s89
    %p98 = scmp.eq.s32.totalorder %s15, 0
    %p99 = por %p97, %p98
    %p100 = scmp.ne.s32.totalorder %s88, %s89
    %p101 = scmp.eq.s32.totalorder %s16, 1
    %p102 = por %p100, %p101
    %p104 = scmp.ne.s32.totalorder %s89, %s103
    %p105 = scmp.eq.s32.totalorder %s16, 0
    %p106 = por %p104, %p105
    %s107 = ssub.s32 %s10, %s17
    %p108 = scmp.eq.s32.totalorder %s107, 0
    %s110 = sadd.s32 %s109, 1
    %s111 = scalar_select %p108, %s109, %s110
    %p114 = pneg %p108
    %p115 = scmp.eq.s32.totalorder %s10, 1
    %p116 = por %p114, %p115
    %p117 = scmp.ne.s32.totalorder %s109, %s112
    %p118 = scmp.eq.s32.totalorder %s10, 0
    %p119 = por %p117, %p118
    %p120 = scmp.ne.s32.totalorder %s109, %s112
    %p121 = scmp.eq.s32.totalorder %s15, 1
    %p122 = por %p120, %p121
    %p123 = scmp.ne.s32.totalorder %s112, %s113
    %p124 = scmp.eq.s32.totalorder %s15, 0
    %p125 = por %p123, %p124
    %p126 = scmp.ne.s32.totalorder %s112, %s113
    %p127 = scmp.eq.s32.totalorder %s16, 1
    %p128 = por %p126, %p127
    %p130 = scmp.ne.s32.totalorder %s113, %s129
    %p131 = scmp.eq.s32.totalorder %s16, 0
    %p132 = por %p130, %p131
    %p133 = scmp.le.s32.totalorder 1, %s10
    %p134 = scmp.lt.s32.totalorder %s10, 3
    %p135 = pnand %p133, %p134
    %p136 = pneg %p135
    // Predicated region
    $region9: #{tpu_custom_call.1} parent=5 // pred_check
      _
    $region10: #{tpu_custom_call.1} parent=5 // pred_check_branch
      %138 = sbr.rel (%p135) target = $region12
    $region11: #{tpu_custom_call.1} parent=5 // pred_region
      %s139 = ssub.s32 %s10, 1
      // Predicated region
      $region13: #{tpu_custom_call.1} parent=11 // pred_check
        %p140 = pneg %p57
      $region14: #{tpu_custom_call.1} parent=11 // pred_check_branch
        %142 = sbr.rel (%p140) target = $region16
      $region15: #{tpu_custom_call.1} parent=11 // pred_region
        _
      $region16: #{tpu_custom_call.1} parent=11 // pred_fallthru
        _
      // Predicated region
      $region17: #{tpu_custom_call.1} parent=11 // pred_check
        %p143 = pneg %p78
      $region18: #{tpu_custom_call.1} parent=11 // pred_check_branch
        %145 = sbr.rel (%p143) target = $region20
      $region19: #{tpu_custom_call.1} parent=11 // pred_region
        _
      $region20: #{tpu_custom_call.1} parent=11 // pred_fallthru
        _
      // Predicated region
      $region21: #{tpu_custom_call.1} parent=11 // pred_check
        %p146 = pneg %p99
      $region22: #{tpu_custom_call.1} parent=11 // pred_check_branch
        %148 = sbr.rel (%p146) target = $region24
      $region23: #{tpu_custom_call.1} parent=11 // pred_region
        _
      $region24: #{tpu_custom_call.1} parent=11 // pred_fallthru
        _
    $region12: #{tpu_custom_call.1} parent=5 // pred_fallthru
      _
    %p149 = scmp.lt.s32.totalorder %s10, 2
    // Predicated region
    $region25: #{tpu_custom_call.1} parent=5 // pred_check
      %p150 = pneg %p149
    $region26: #{tpu_custom_call.1} parent=5 // pred_check_branch
      %152 = sbr.rel (%p150) target = $region28
    $region27: #{tpu_custom_call.1} parent=5 // pred_region
      // Predicated region
      $region29: #{tpu_custom_call.1} parent=27 // pred_check
        %p153 = pneg %p30
      $region30: #{tpu_custom_call.1} parent=27 // pred_check_branch
        %155 = sbr.rel (%p153) target = $region32
      $region31: #{tpu_custom_call.1} parent=27 // pred_region
        %p156 = scmp.lt.s32.totalorder %s10, 1
        %s157 = scalar_select %p156, %s10, 1
        %s158 = smul.addr %s157, 16
        %s159 = smul.addr %s158, 8
        %s160 = scalar_lea.vmem %s0, %s159
      $region32: #{tpu_custom_call.1} parent=27 // pred_fallthru
        _
    $region28: #{tpu_custom_call.1} parent=5 // pred_fallthru
      _
    %p161 = scmp.le.s32.totalorder 1, %s10
    %p162 = scmp.lt.s32.totalorder %s10, 3
    %p163 = pnand %p161, %p162
    %p164 = pneg %p163
    // Predicated region
    $region33: #{tpu_custom_call.1} parent=5 // pred_check
      _
    $region34: #{tpu_custom_call.1} parent=5 // pred_check_branch
      %166 = sbr.rel (%p163) target = $region36
    $region35: #{tpu_custom_call.1} parent=5 // pred_region
      %s167 = ssub.s32 %s10, 1
      %p168 = scmp.lt.s32.totalorder %s15, 1
      %s169 = scalar_select %p168, %s15, 1
      %s170 = smul.addr %s169, 16
      %s171 = smul.addr %s170, 8
      %s172 = scalar_lea.vmem %s0, %s171
      %p173 = pneg %p36
      %p174 = pneg %p33
      %p175 = pneg %p57
      %p176 = pneg %p54
      %p177 = pneg %p78
      %p178 = pneg %p75
      %p179 = pneg %p99
      %p180 = pneg %p96
      %p181 = pneg %p125
      %p182 = pneg %p122
      %p183 = scmp.lt.s32.totalorder %s15, 1
      %s184 = scalar_select %p183, %s15, 1
      %s185 = smul.addr %s184, 16
      %s186 = smul.addr %s185, 8
      %s187 = scalar_lea.vmem %s4, %s186
      %p188 = scmp.lt.s32.totalorder %s15, 1
      %s189 = scalar_select %p188, %s15, 1
      %s190 = smul.addr %s189, 16
      %s191 = smul.addr %s190, 8
      %s192 = scalar_lea.vmem %s0, %s191
      %p193 = scmp.lt.s32.totalorder %s15, 1
      %s194 = scalar_select %p193, %s15, 1
      %s195 = smul.addr %s194, 16
      %s196 = smul.addr %s195, 8
      %s197 = scalar_lea.vmem %s4, %s196
      %v198 = vld [vmem:[%s192] sm:$0xff]
      %v199 = vld [vmem:[%s192 + $0x8] sm:$0xff]
      %v200 = vld [vmem:[%s192 + $0x10] sm:$0xff]
      %v201 = vld [vmem:[%s192 + $0x18] sm:$0xff]
      %v202 = vld [vmem:[%s192 + $0x20] sm:$0xff]
      %v203 = vld [vmem:[%s192 + $0x28] sm:$0xff]
      %v204 = vld [vmem:[%s192 + $0x30] sm:$0xff]
      %v205 = vld [vmem:[%s192 + $0x38] sm:$0xff]
      %v206 = vld [vmem:[%s192 + $0x40] sm:$0xff]
      %v207 = vld [vmem:[%s192 + $0x48] sm:$0xff]
      %v208 = vld [vmem:[%s192 + $0x50] sm:$0xff]
      %v209 = vld [vmem:[%s192 + $0x58] sm:$0xff]
      %v210 = vld [vmem:[%s192 + $0x60] sm:$0xff]
      %v211 = vld [vmem:[%s192 + $0x68] sm:$0xff]
      %v212 = vld [vmem:[%s192 + $0x70] sm:$0xff]
      %v213 = vld [vmem:[%s192 + $0x78] sm:$0xff]
      %v214 = vld [vmem:[%s1] sm:$0x3f]
      %215 = vmatprep.subr.mxu0 0.0
      %216 = vmatpush1.msra.mxu0 %v198
      %217 = vmatprep.subr.mxu0 0.0
      %218 = vmatpush1.msra.mxu0 %v199
      %219 = vmatprep.subr.mxu0 0.0
      %220 = vmatpush1.msra.mxu0 %v200
      %221 = vmatprep.subr.mxu0 0.0
      %222 = vmatpush1.msra.mxu0 %v201
      %223 = vmatprep.subr.mxu0 0.0
      %224 = vmatpush1.msra.mxu0 %v202
      %225 = vmatprep.subr.mxu0 0.0
      %226 = vmatpush1.msra.mxu0 %v203
      %227 = vmatprep.subr.mxu0 0.0
      %228 = vmatpush1.msra.mxu0 %v204
      %229 = vmatprep.subr.mxu0 0.0
      %230 = vmatpush1.msra.mxu0 %v205
      %231 = vmatprep.subr.mxu0 0.0
      %232 = vmatpush1.msra.mxu0 %v206
      %233 = vmatprep.subr.mxu0 0.0
      %234 = vmatpush1.msra.mxu0 %v207
      %235 = vmatprep.subr.mxu0 0.0
      %236 = vmatpush1.msra.mxu0 %v208
      %237 = vmatprep.subr.mxu0 0.0
      %238 = vmatpush1.msra.mxu0 %v209
      %239 = vmatprep.subr.mxu0 0.0
      %240 = vmatpush1.msra.mxu0 %v210
      %241 = vmatprep.subr.mxu0 0.0
      %242 = vmatpush1.msra.mxu0 %v211
      %243 = vmatprep.subr.mxu0 0.0
      %244 = vmatpush1.msra.mxu0 %v212
      %245 = vmatprep.subr.mxu0 0.0
      %246 = vmatpush1.msra.mxu0 %v213
      %247 = vmatprep.subr.mxu0 0.0
      %248 = vmatpush1.msra.mxu0 0.0
      %249 = vmatprep.subr.mxu0 0.0
      %250 = vmatpush1.msra.mxu0 0.0
      %251 = vmatprep.subr.mxu0 0.0
      %252 = vmatpush1.msra.mxu0 0.0
      %253 = vmatprep.subr.mxu0 0.0
      %254 = vmatpush1.msra.mxu0 0.0
      %255 = vmatprep.subr.mxu0 0.0
      %256 = vmatpush1.msra.mxu0 0.0
      %257 = vmatprep.subr.mxu0 0.0
      %258 = vmatpush1.msra.mxu0 0.0
      %259 = vmatprep.subr.mxu0 0.0
      %260 = vmatpush1.msra.mxu0 0.0
      %261 = vmatprep.subr.mxu0 0.0
      %262 = vmatpush1.msra.mxu0 0.0
      %263 = vmatprep.subr.mxu0 0.0
      %264 = vmatpush1.msra.mxu0 0.0
      %265 = vmatprep.subr.mxu0 0.0
      %266 = vmatpush1.msra.mxu0 0.0
      %267 = vmatprep.subr.mxu0 0.0
      %268 = vmatpush1.msra.mxu0 0.0
      %269 = vmatprep.subr.mxu0 0.0
      %270 = vmatpush1.msra.mxu0 0.0
      %271 = vmatprep.subr.mxu0 0.0
      %272 = vmatpush1.msra.mxu0 0.0
      %273 = vmatprep.subr.mxu0 0.0
      %274 = vmatpush1.msra.mxu0 0.0
      %275 = vmatprep.subr.mxu0 0.0
      %276 = vmatpush1.msra.mxu0 0.0
      %277 = vmatprep.subr.mxu0 0.0
      %278 = vmatpush1.msra.mxu0 0.0
      %279 = vmatprep.mubr.f32.mxu0 0.0
      %280 = vmatmul.mubr.f32.gmra.mrb[0].mxu0 %v214
      %v281 = vpop.f32.mrb[0].mxu0
      %v282 = vadd.f32 0.0, %v281
      %v283 = vpop.f32.mrb[0].mxu0
      %284 = vdwg.mxu0
      %vm285 = vcmask 193536
      %v286 = vsel %vm285, %v282, -inf
      %v287 = vrot.slane %v286, 4
      %v288 = vmax.f32 %v286, %v287
      %v289 = vrot.slane %v288, 2
      %v290 = vmax.f32 %v288, %v289
      %v291 = vrot.slane %v290, 1
      %v292 = vmax.f32 %v290, %v291
      %v293 = vsub.f32 %v282, %v292
      %v294 = vmul.f32 %v293, 1.442695
      %v295 = vpow.pop %v294
      %v296 = vsel %vm285, %v295, 0.0
      %v297 = vrot.slane %v296, 4
      %v298 = vadd.f32 %v296, %v297
      %v299 = vrot.slane %v298, 2
      %v300 = vadd.f32 %v298, %v299
      %v301 = vrot.slane %v300, 1
      %v302 = vadd.f32 %v300, %v301
      %v303 = vrcp.pop %v302
      %v304 = vmul.f32 %v295, %v303
      %v305 = vld [vmem:[%s2] sm:$0xff]
      %v306 = vld [vmem:[%s2 + $0x8] sm:$0xff]
      %v307 = vld [vmem:[%s2 + $0x10] sm:$0xff]
      %v308 = vld [vmem:[%s2 + $0x18] sm:$0xff]
      %v309 = vld [vmem:[%s2 + $0x20] sm:$0xff]
      %v310 = vld [vmem:[%s2 + $0x28] sm:$0xff]
      %v311 = vld [vmem:[%s2 + $0x30] sm:$0xff]
      %v312 = vld [vmem:[%s2 + $0x38] sm:$0xff]
      %v313 = vld [vmem:[%s2 + $0x40] sm:$0xff]
      %v314 = vld [vmem:[%s2 + $0x48] sm:$0xff]
      %v315 = vld [vmem:[%s2 + $0x50] sm:$0xff]
      %v316 = vld [vmem:[%s2 + $0x58] sm:$0xff]
      %v317 = vld [vmem:[%s2 + $0x60] sm:$0xff]
      %v318 = vld [vmem:[%s2 + $0x68] sm:$0xff]
      %v319 = vld [vmem:[%s2 + $0x70] sm:$0xff]
      %v320 = vld [vmem:[%s2 + $0x78] sm:$0xff]
      %322 = vset.pattern.permute.xlu0 0
      %323 = vperm.xlu0 %322, %v305
      %v324 = vpop.permute.xlu0 %323
      %327 = vset.pattern.permute.xlu0 0
      %328 = vperm.xlu0 %327, %v306
      %v329 = vpop.permute.xlu0 %328
      %332 = vset.pattern.permute.xlu0 0
      %333 = vperm.xlu0 %332, %v307
      %v334 = vpop.permute.xlu0 %333
      %337 = vset.pattern.permute.xlu0 0
      %338 = vperm.xlu0 %337, %v308
      %v339 = vpop.permute.xlu0 %338
      %342 = vset.pattern.permute.xlu0 0
      %343 = vperm.xlu0 %342, %v309
      %v344 = vpop.permute.xlu0 %343
      %347 = vset.pattern.permute.xlu0 0
      %348 = vperm.xlu0 %347, %v310
      %v349 = vpop.permute.xlu0 %348
      %352 = vset.pattern.permute.xlu0 0
      %353 = vperm.xlu0 %352, %v311
      %v354 = vpop.permute.xlu0 %353
      %357 = vset.pattern.permute.xlu0 0
      %358 = vperm.xlu0 %357, %v312
      %v359 = vpop.permute.xlu0 %358
      %362 = vset.pattern.permute.xlu0 0
      %363 = vperm.xlu0 %362, %v313
      %v364 = vpop.permute.xlu0 %363
      %367 = vset.pattern.permute.xlu0 0
      %368 = vperm.xlu0 %367, %v314
      %v369 = vpop.permute.xlu0 %368
      %372 = vset.pattern.permute.xlu0 0
      %373 = vperm.xlu0 %372, %v315
      %v374 = vpop.permute.xlu0 %373
      %377 = vset.pattern.permute.xlu0 0
      %378 = vperm.xlu0 %377, %v316
      %v379 = vpop.permute.xlu0 %378
      %382 = vset.pattern.permute.xlu0 0
      %383 = vperm.xlu0 %382, %v317
      %v384 = vpop.permute.xlu0 %383
      %387 = vset.pattern.permute.xlu0 0
      %388 = vperm.xlu0 %387, %v318
      %v389 = vpop.permute.xlu0 %388
      %392 = vset.pattern.permute.xlu0 0
      %393 = vperm.xlu0 %392, %v319
      %v394 = vpop.permute.xlu0 %393
      %397 = vset.pattern.permute.xlu0 0
      %398 = vperm.xlu0 %397, %v320
      %v399 = vpop.permute.xlu0 %398
      %v401 = vmul.f32 %v198, %v324
      %v402 = vmul.f32 %v199, %v329
      %v403 = vmul.f32 %v200, %v334
      %v404 = vmul.f32 %v201, %v339
      %v405 = vmul.f32 %v202, %v344
      %v406 = vmul.f32 %v203, %v349
      %v407 = vmul.f32 %v204, %v354
      %v408 = vmul.f32 %v205, %v359
      %v409 = vmul.f32 %v206, %v364
      %v410 = vmul.f32 %v207, %v369
      %v411 = vmul.f32 %v208, %v374
      %v412 = vmul.f32 %v209, %v379
      %v413 = vmul.f32 %v210, %v384
      %v414 = vmul.f32 %v211, %v389
      %v415 = vmul.f32 %v212, %v394
      %v416 = vmul.f32 %v213, %v399
      %v417 = vld [vmem:[%s3] sm:$0xff]
      %v418 = vld [vmem:[%s3 + $0x8] sm:$0xff]
      %v419 = vld [vmem:[%s3 + $0x10] sm:$0xff]
      %v420 = vld [vmem:[%s3 + $0x18] sm:$0xff]
      %v421 = vld [vmem:[%s3 + $0x20] sm:$0xff]
      %v422 = vld [vmem:[%s3 + $0x28] sm:$0xff]
      %v423 = vld [vmem:[%s3 + $0x30] sm:$0xff]
      %v424 = vld [vmem:[%s3 + $0x38] sm:$0xff]
      %v425 = vld [vmem:[%s3 + $0x40] sm:$0xff]
      %v426 = vld [vmem:[%s3 + $0x48] sm:$0xff]
      %v427 = vld [vmem:[%s3 + $0x50] sm:$0xff]
      %v428 = vld [vmem:[%s3 + $0x58] sm:$0xff]
      %v429 = vld [vmem:[%s3 + $0x60] sm:$0xff]
      %v430 = vld [vmem:[%s3 + $0x68] sm:$0xff]
      %v431 = vld [vmem:[%s3 + $0x70] sm:$0xff]
      %v432 = vld [vmem:[%s3 + $0x78] sm:$0xff]
      %434 = vset.pattern.permute.xlu0 0
      %435 = vperm.xlu0 %434, %v417
      %v436 = vpop.permute.xlu0 %435
      %439 = vset.pattern.permute.xlu0 0
      %440 = vperm.xlu0 %439, %v418
      %v441 = vpop.permute.xlu0 %440
      %444 = vset.pattern.permute.xlu0 0
      %445 = vperm.xlu0 %444, %v419
      %v446 = vpop.permute.xlu0 %445
      %449 = vset.pattern.permute.xlu0 0
      %450 = vperm.xlu0 %449, %v420
      %v451 = vpop.permute.xlu0 %450
      %454 = vset.pattern.permute.xlu0 0
      %455 = vperm.xlu0 %454, %v421
      %v456 = vpop.permute.xlu0 %455
      %459 = vset.pattern.permute.xlu0 0
      %460 = vperm.xlu0 %459, %v422
      %v461 = vpop.permute.xlu0 %460
      %464 = vset.pattern.permute.xlu0 0
      %465 = vperm.xlu0 %464, %v423
      %v466 = vpop.permute.xlu0 %465
      %469 = vset.pattern.permute.xlu0 0
      %470 = vperm.xlu0 %469, %v424
      %v471 = vpop.permute.xlu0 %470
      %474 = vset.pattern.permute.xlu0 0
      %475 = vperm.xlu0 %474, %v425
      %v476 = vpop.permute.xlu0 %475
      %479 = vset.pattern.permute.xlu0 0
      %480 = vperm.xlu0 %479, %v426
      %v481 = vpop.permute.xlu0 %480
      %484 = vset.pattern.permute.xlu0 0
      %485 = vperm.xlu0 %484, %v427
      %v486 = vpop.permute.xlu0 %485
      %489 = vset.pattern.permute.xlu0 0
      %490 = vperm.xlu0 %489, %v428
      %v491 = vpop.permute.xlu0 %490
      %494 = vset.pattern.permute.xlu0 0
      %495 = vperm.xlu0 %494, %v429
      %v496 = vpop.permute.xlu0 %495
      %499 = vset.pattern.permute.xlu0 0
      %500 = vperm.xlu0 %499, %v430
      %v501 = vpop.permute.xlu0 %500
      %504 = vset.pattern.permute.xlu0 0
      %505 = vperm.xlu0 %504, %v431
      %v506 = vpop.permute.xlu0 %505
      %509 = vset.pattern.permute.xlu0 0
      %510 = vperm.xlu0 %509, %v432
      %v511 = vpop.permute.xlu0 %510
      %v513 = vlaneseq
      %v514 = vshrl.u32 %v513, 7
      %v515 = vlaneseq
      %v516 = vand.u32 %v515, 127
      %vm517 = vcmp.eq.s32.totalorder %v514, %v516
      %v518 = vsel %vm517, 1, 0
      %v519 = vcvt.s32.f32 %v518
      %v520 = vlaneseq
      %v521 = vshrl.u32 %v520, 7
      %v522 = vsub.s32 0, %v521
      %v523 = vrot.slane %v304, %v522
      %v524 = vmul.f32 %v401, %v523
      %v525 = vmul.f32 %v402, %v523
      %v526 = vmul.f32 %v403, %v523
      %v527 = vmul.f32 %v404, %v523
      %v528 = vmul.f32 %v405, %v523
      %v529 = vmul.f32 %v406, %v523
      %v530 = vmul.f32 %v407, %v523
      %v531 = vmul.f32 %v408, %v523
      %v532 = vmul.f32 %v409, %v523
      %v533 = vmul.f32 %v410, %v523
      %v534 = vmul.f32 %v411, %v523
      %v535 = vmul.f32 %v412, %v523
      %v536 = vmul.f32 %v413, %v523
      %v537 = vmul.f32 %v414, %v523
      %v538 = vmul.f32 %v415, %v523
      %v539 = vmul.f32 %v416, %v523
      %v540 = vadd.f32 %v524, %v436
      %v541 = vadd.f32 %v525, %v441
      %v542 = vadd.f32 %v526, %v446
      %v543 = vadd.f32 %v527, %v451
      %v544 = vadd.f32 %v528, %v456
      %v545 = vadd.f32 %v529, %v461
      %v546 = vadd.f32 %v530, %v466
      %v547 = vadd.f32 %v531, %v471
      %v548 = vadd.f32 %v532, %v476
      %v549 = vadd.f32 %v533, %v481
      %v550 = vadd.f32 %v534, %v486
      %v551 = vadd.f32 %v535, %v491
      %v552 = vadd.f32 %v536, %v496
      %v553 = vadd.f32 %v537, %v501
      %v554 = vadd.f32 %v538, %v506
      %v555 = vadd.f32 %v539, %v511
      %v556 = vmax.f32 %v540, 0.0
      %v557 = vmax.f32 %v541, 0.0
      %v558 = vmax.f32 %v542, 0.0
      %v559 = vmax.f32 %v543, 0.0
      %v560 = vmax.f32 %v544, 0.0
      %v561 = vmax.f32 %v545, 0.0
      %v562 = vmax.f32 %v546, 0.0
      %v563 = vmax.f32 %v547, 0.0
      %v564 = vmax.f32 %v548, 0.0
      %v565 = vmax.f32 %v549, 0.0
      %v566 = vmax.f32 %v550, 0.0
      %v567 = vmax.f32 %v551, 0.0
      %v568 = vmax.f32 %v552, 0.0
      %v569 = vmax.f32 %v553, 0.0
      %v570 = vmax.f32 %v554, 0.0
      %v571 = vmax.f32 %v555, 0.0
      %vm572 = vcmask 195584
      %v573 = vsel %vm572, %v556, 0.0
      %574 = vadd.xlane.f32.xlu0 %v573
      %v575 = vpop.xlane.xlu0 %574
      %v576 = vsel %vm572, %v557, 0.0
      %577 = vadd.xlane.f32.xlu0 %v576
      %v578 = vpop.xlane.xlu0 %577
      %v579 = vsel %vm572, %v558, 0.0
      %580 = vadd.xlane.f32.xlu0 %v579
      %v581 = vpop.xlane.xlu0 %580
      %v582 = vsel %vm572, %v559, 0.0
      %583 = vadd.xlane.f32.xlu0 %v582
      %v584 = vpop.xlane.xlu0 %583
      %v585 = vsel %vm572, %v560, 0.0
      %586 = vadd.xlane.f32.xlu0 %v585
      %v587 = vpop.xlane.xlu0 %586
      %v588 = vsel %vm572, %v561, 0.0
      %589 = vadd.xlane.f32.xlu0 %v588
      %v590 = vpop.xlane.xlu0 %589
      %v591 = vsel %vm572, %v562, 0.0
      %592 = vadd.xlane.f32.xlu0 %v591
      %v593 = vpop.xlane.xlu0 %592
      %v594 = vsel %vm572, %v563, 0.0
      %595 = vadd.xlane.f32.xlu0 %v594
      %v596 = vpop.xlane.xlu0 %595
      %v597 = vsel %vm572, %v564, 0.0
      %598 = vadd.xlane.f32.xlu0 %v597
      %v599 = vpop.xlane.xlu0 %598
      %v600 = vsel %vm572, %v565, 0.0
      %601 = vadd.xlane.f32.xlu0 %v600
      %v602 = vpop.xlane.xlu0 %601
      %v603 = vsel %vm572, %v566, 0.0
      %604 = vadd.xlane.f32.xlu0 %v603
      %v605 = vpop.xlane.xlu0 %604
      %v606 = vsel %vm572, %v567, 0.0
      %607 = vadd.xlane.f32.xlu0 %v606
      %v608 = vpop.xlane.xlu0 %607
      %v609 = vsel %vm572, %v568, 0.0
      %610 = vadd.xlane.f32.xlu0 %v609
      %v611 = vpop.xlane.xlu0 %610
      %v612 = vsel %vm572, %v569, 0.0
      %613 = vadd.xlane.f32.xlu0 %v612
      %v614 = vpop.xlane.xlu0 %613
      %v615 = vsel %vm572, %v570, 0.0
      %616 = vadd.xlane.f32.xlu0 %v615
      %v617 = vpop.xlane.xlu0 %616
      %v618 = vsel %vm572, %v571, 0.0
      %619 = vadd.xlane.f32.xlu0 %v618
      %v620 = vpop.xlane.xlu0 %619
      %v621 = vlaneseq
      %v622 = vshrl.u32 %v621, 7
      %v623 = vsub.s32 0, %v622
      %v624 = vrot.slane %v519, %v623
      %v625 = vmul.f32 %v575, %v624
      %v626 = vmul.f32 %v578, %v624
      %v627 = vmul.f32 %v581, %v624
      %v628 = vmul.f32 %v584, %v624
      %v629 = vmul.f32 %v587, %v624
      %v630 = vmul.f32 %v590, %v624
      %v631 = vmul.f32 %v593, %v624
      %v632 = vmul.f32 %v596, %v624
      %v633 = vmul.f32 %v599, %v624
      %v634 = vmul.f32 %v602, %v624
      %v635 = vmul.f32 %v605, %v624
      %v636 = vmul.f32 %v608, %v624
      %v637 = vmul.f32 %v611, %v624
      %v638 = vmul.f32 %v614, %v624
      %v639 = vmul.f32 %v617, %v624
      %v640 = vmul.f32 %v620, %v624
      %v641 = vadd.f32 %v625, 0.0
      %v642 = vadd.f32 %v626, 0.0
      %v643 = vadd.f32 %v627, 0.0
      %v644 = vadd.f32 %v628, 0.0
      %v645 = vadd.f32 %v629, 0.0
      %v646 = vadd.f32 %v630, 0.0
      %v647 = vadd.f32 %v631, 0.0
      %v648 = vadd.f32 %v632, 0.0
      %v649 = vadd.f32 %v633, 0.0
      %v650 = vadd.f32 %v634, 0.0
      %v651 = vadd.f32 %v635, 0.0
      %v652 = vadd.f32 %v636, 0.0
      %v653 = vadd.f32 %v637, 0.0
      %v654 = vadd.f32 %v638, 0.0
      %v655 = vadd.f32 %v639, 0.0
      %v656 = vadd.f32 %v640, 0.0
      %v657 = vlaneseq
      %v658 = vshrl.u32 %v657, 7
      %v659 = vsub.s32 1, %v658
      %v660 = vrot.slane %v304, %v659
      %v661 = vmul.f32 %v401, %v660
      %v662 = vmul.f32 %v402, %v660
      %v663 = vmul.f32 %v403, %v660
      %v664 = vmul.f32 %v404, %v660
      %v665 = vmul.f32 %v405, %v660
      %v666 = vmul.f32 %v406, %v660
      %v667 = vmul.f32 %v407, %v660
      %v668 = vmul.f32 %v408, %v660
      %v669 = vmul.f32 %v409, %v660
      %v670 = vmul.f32 %v410, %v660
      %v671 = vmul.f32 %v411, %v660
      %v672 = vmul.f32 %v412, %v660
      %v673 = vmul.f32 %v413, %v660
      %v674 = vmul.f32 %v414, %v660
      %v675 = vmul.f32 %v415, %v660
      %v676 = vmul.f32 %v416, %v660
      %v677 = vadd.f32 %v661, %v436
      %v678 = vadd.f32 %v662, %v441
      %v679 = vadd.f32 %v663, %v446
      %v680 = vadd.f32 %v664, %v451
      %v681 = vadd.f32 %v665, %v456
      %v682 = vadd.f32 %v666, %v461
      %v683 = vadd.f32 %v667, %v466
      %v684 = vadd.f32 %v668, %v471
      %v685 = vadd.f32 %v669, %v476
      %v686 = vadd.f32 %v670, %v481
      %v687 = vadd.f32 %v671, %v486
      %v688 = vadd.f32 %v672, %v491
      %v689 = vadd.f32 %v673, %v496
      %v690 = vadd.f32 %v674, %v501
      %v691 = vadd.f32 %v675, %v506
      %v692 = vadd.f32 %v676, %v511
      %v693 = vmax.f32 %v677, 0.0
      %v694 = vmax.f32 %v678, 0.0
      %v695 = vmax.f32 %v679, 0.0
      %v696 = vmax.f32 %v680, 0.0
      %v697 = vmax.f32 %v681, 0.0
      %v698 = vmax.f32 %v682, 0.0
      %v699 = vmax.f32 %v683, 0.0
      %v700 = vmax.f32 %v684, 0.0
      %v701 = vmax.f32 %v685, 0.0
      %v702 = vmax.f32 %v686, 0.0
      %v703 = vmax.f32 %v687, 0.0
      %v704 = vmax.f32 %v688, 0.0
      %v705 = vmax.f32 %v689, 0.0
      %v706 = vmax.f32 %v690, 0.0
      %v707 = vmax.f32 %v691, 0.0
      %v708 = vmax.f32 %v692, 0.0
      %v709 = vsel %vm572, %v693, 0.0
      %710 = vadd.xlane.f32.xlu0 %v709
      %v711 = vpop.xlane.xlu0 %710
      %v712 = vsel %vm572, %v694, 0.0
      %713 = vadd.xlane.f32.xlu0 %v712
      %v714 = vpop.xlane.xlu0 %713
      %v715 = vsel %vm572, %v695, 0.0
      %716 = vadd.xlane.f32.xlu0 %v715
      %v717 = vpop.xlane.xlu0 %716
      %v718 = vsel %vm572, %v696, 0.0
      %719 = vadd.xlane.f32.xlu0 %v718
      %v720 = vpop.xlane.xlu0 %719
      %v721 = vsel %vm572, %v697, 0.0
      %722 = vadd.xlane.f32.xlu0 %v721
      %v723 = vpop.xlane.xlu0 %722
      %v724 = vsel %vm572, %v698, 0.0
      %725 = vadd.xlane.f32.xlu0 %v724
      %v726 = vpop.xlane.xlu0 %725
      %v727 = vsel %vm572, %v699, 0.0
      %728 = vadd.xlane.f32.xlu0 %v727
      %v729 = vpop.xlane.xlu0 %728
      %v730 = vsel %vm572, %v700, 0.0
      %731 = vadd.xlane.f32.xlu0 %v730
      %v732 = vpop.xlane.xlu0 %731
      %v733 = vsel %vm572, %v701, 0.0
      %734 = vadd.xlane.f32.xlu0 %v733
      %v735 = vpop.xlane.xlu0 %734
      %v736 = vsel %vm572, %v702, 0.0
      %737 = vadd.xlane.f32.xlu0 %v736
      %v738 = vpop.xlane.xlu0 %737
      %v739 = vsel %vm572, %v703, 0.0
      %740 = vadd.xlane.f32.xlu0 %v739
      %v741 = vpop.xlane.xlu0 %740
      %v742 = vsel %vm572, %v704, 0.0
      %743 = vadd.xlane.f32.xlu0 %v742
      %v744 = vpop.xlane.xlu0 %743
      %v745 = vsel %vm572, %v705, 0.0
      %746 = vadd.xlane.f32.xlu0 %v745
      %v747 = vpop.xlane.xlu0 %746
      %v748 = vsel %vm572, %v706, 0.0
      %749 = vadd.xlane.f32.xlu0 %v748
      %v750 = vpop.xlane.xlu0 %749
      %v751 = vsel %vm572, %v707, 0.0
      %752 = vadd.xlane.f32.xlu0 %v751
      %v753 = vpop.xlane.xlu0 %752
      %v754 = vsel %vm572, %v708, 0.0
      %755 = vadd.xlane.f32.xlu0 %v754
      %v756 = vpop.xlane.xlu0 %755
      %v757 = vlaneseq
      %v758 = vshrl.u32 %v757, 7
      %v759 = vsub.s32 1, %v758
      %v760 = vrot.slane %v519, %v759
      %v761 = vmul.f32 %v711, %v760
      %v762 = vmul.f32 %v714, %v760
      %v763 = vmul.f32 %v717, %v760
      %v764 = vmul.f32 %v720, %v760
      %v765 = vmul.f32 %v723, %v760
      %v766 = vmul.f32 %v726, %v760
      %v767 = vmul.f32 %v729, %v760
      %v768 = vmul.f32 %v732, %v760
      %v769 = vmul.f32 %v735, %v760
      %v770 = vmul.f32 %v738, %v760
      %v771 = vmul.f32 %v741, %v760
      %v772 = vmul.f32 %v744, %v760
      %v773 = vmul.f32 %v747, %v760
      %v774 = vmul.f32 %v750, %v760
      %v775 = vmul.f32 %v753, %v760
      %v776 = vmul.f32 %v756, %v760
      %v777 = vadd.f32 %v641, %v761
      %v778 = vadd.f32 %v642, %v762
      %v779 = vadd.f32 %v643, %v763
      %v780 = vadd.f32 %v644, %v764
      %v781 = vadd.f32 %v645, %v765
      %v782 = vadd.f32 %v646, %v766
      %v783 = vadd.f32 %v647, %v767
      %v784 = vadd.f32 %v648, %v768
      %v785 = vadd.f32 %v649, %v769
      %v786 = vadd.f32 %v650, %v770
      %v787 = vadd.f32 %v651, %v771
      %v788 = vadd.f32 %v652, %v772
      %v789 = vadd.f32 %v653, %v773
      %v790 = vadd.f32 %v654, %v774
      %v791 = vadd.f32 %v655, %v775
      %v792 = vadd.f32 %v656, %v776
      %v793 = vlaneseq
      %v794 = vshrl.u32 %v793, 7
      %v795 = vsub.s32 2, %v794
      %v796 = vrot.slane %v304, %v795
      %v797 = vmul.f32 %v401, %v796
      %v798 = vmul.f32 %v402, %v796
      %v799 = vmul.f32 %v403, %v796
      %v800 = vmul.f32 %v404, %v796
      %v801 = vmul.f32 %v405, %v796
      %v802 = vmul.f32 %v406, %v796
      %v803 = vmul.f32 %v407, %v796
      %v804 = vmul.f32 %v408, %v796
      %v805 = vmul.f32 %v409, %v796
      %v806 = vmul.f32 %v410, %v796
      %v807 = vmul.f32 %v411, %v796
      %v808 = vmul.f32 %v412, %v796
      %v809 = vmul.f32 %v413, %v796
      %v810 = vmul.f32 %v414, %v796
      %v811 = vmul.f32 %v415, %v796
      %v812 = vmul.f32 %v416, %v796
      %v813 = vadd.f32 %v797, %v436
      %v814 = vadd.f32 %v798, %v441
      %v815 = vadd.f32 %v799, %v446
      %v816 = vadd.f32 %v800, %v451
      %v817 = vadd.f32 %v801, %v456
      %v818 = vadd.f32 %v802, %v461
      %v819 = vadd.f32 %v803, %v466
      %v820 = vadd.f32 %v804, %v471
      %v821 = vadd.f32 %v805, %v476
      %v822 = vadd.f32 %v806, %v481
      %v823 = vadd.f32 %v807, %v486
      %v824 = vadd.f32 %v808, %v491
      %v825 = vadd.f32 %v809, %v496
      %v826 = vadd.f32 %v810, %v501
      %v827 = vadd.f32 %v811, %v506
      %v828 = vadd.f32 %v812, %v511
      %v829 = vmax.f32 %v813, 0.0
      %v830 = vmax.f32 %v814, 0.0
      %v831 = vmax.f32 %v815, 0.0
      %v832 = vmax.f32 %v816, 0.0
      %v833 = vmax.f32 %v817, 0.0
      %v834 = vmax.f32 %v818, 0.0
      %v835 = vmax.f32 %v819, 0.0
      %v836 = vmax.f32 %v820, 0.0
      %v837 = vmax.f32 %v821, 0.0
      %v838 = vmax.f32 %v822, 0.0
      %v839 = vmax.f32 %v823, 0.0
      %v840 = vmax.f32 %v824, 0.0
      %v841 = vmax.f32 %v825, 0.0
      %v842 = vmax.f32 %v826, 0.0
      %v843 = vmax.f32 %v827, 0.0
      %v844 = vmax.f32 %v828, 0.0
      %v845 = vsel %vm572, %v829, 0.0
      %846 = vadd.xlane.f32.xlu0 %v845
      %v847 = vpop.xlane.xlu0 %846
      %v848 = vsel %vm572, %v830, 0.0
      %849 = vadd.xlane.f32.xlu0 %v848
      %v850 = vpop.xlane.xlu0 %849
      %v851 = vsel %vm572, %v831, 0.0
      %852 = vadd.xlane.f32.xlu0 %v851
      %v853 = vpop.xlane.xlu0 %852
      %v854 = vsel %vm572, %v832, 0.0
      %855 = vadd.xlane.f32.xlu0 %v854
      %v856 = vpop.xlane.xlu0 %855
      %v857 = vsel %vm572, %v833, 0.0
      %858 = vadd.xlane.f32.xlu0 %v857
      %v859 = vpop.xlane.xlu0 %858
      %v860 = vsel %vm572, %v834, 0.0
      %861 = vadd.xlane.f32.xlu0 %v860
      %v862 = vpop.xlane.xlu0 %861
      %v863 = vsel %vm572, %v835, 0.0
      %864 = vadd.xlane.f32.xlu0 %v863
      %v865 = vpop.xlane.xlu0 %864
      %v866 = vsel %vm572, %v836, 0.0
      %867 = vadd.xlane.f32.xlu0 %v866
      %v868 = vpop.xlane.xlu0 %867
      %v869 = vsel %vm572, %v837, 0.0
      %870 = vadd.xlane.f32.xlu0 %v869
      %v871 = vpop.xlane.xlu0 %870
      %v872 = vsel %vm572, %v838, 0.0
      %873 = vadd.xlane.f32.xlu0 %v872
      %v874 = vpop.xlane.xlu0 %873
      %v875 = vsel %vm572, %v839, 0.0
      %876 = vadd.xlane.f32.xlu0 %v875
      %v877 = vpop.xlane.xlu0 %876
      %v878 = vsel %vm572, %v840, 0.0
      %879 = vadd.xlane.f32.xlu0 %v878
      %v880 = vpop.xlane.xlu0 %879
      %v881 = vsel %vm572, %v841, 0.0
      %882 = vadd.xlane.f32.xlu0 %v881
      %v883 = vpop.xlane.xlu0 %882
      %v884 = vsel %vm572, %v842, 0.0
      %885 = vadd.xlane.f32.xlu0 %v884
      %v886 = vpop.xlane.xlu0 %885
      %v887 = vsel %vm572, %v843, 0.0
      %888 = vadd.xlane.f32.xlu0 %v887
      %v889 = vpop.xlane.xlu0 %888
      %v890 = vsel %vm572, %v844, 0.0
      %891 = vadd.xlane.f32.xlu0 %v890
      %v892 = vpop.xlane.xlu0 %891
      %v893 = vlaneseq
      %v894 = vshrl.u32 %v893, 7
      %v895 = vsub.s32 2, %v894
      %v896 = vrot.slane %v519, %v895
      %v897 = vmul.f32 %v847, %v896
      %v898 = vmul.f32 %v850, %v896
      %v899 = vmul.f32 %v853, %v896
      %v900 = vmul.f32 %v856, %v896
      %v901 = vmul.f32 %v859, %v896
      %v902 = vmul.f32 %v862, %v896
      %v903 = vmul.f32 %v865, %v896
      %v904 = vmul.f32 %v868, %v896
      %v905 = vmul.f32 %v871, %v896
      %v906 = vmul.f32 %v874, %v896
      %v907 = vmul.f32 %v877, %v896
      %v908 = vmul.f32 %v880, %v896
      %v909 = vmul.f32 %v883, %v896
      %v910 = vmul.f32 %v886, %v896
      %v911 = vmul.f32 %v889, %v896
      %v912 = vmul.f32 %v892, %v896
      %v913 = vadd.f32 %v777, %v897
      %v914 = vadd.f32 %v778, %v898
      %v915 = vadd.f32 %v779, %v899
      %v916 = vadd.f32 %v780, %v900
      %v917 = vadd.f32 %v781, %v901
      %v918 = vadd.f32 %v782, %v902
      %v919 = vadd.f32 %v783, %v903
      %v920 = vadd.f32 %v784, %v904
      %v921 = vadd.f32 %v785, %v905
      %v922 = vadd.f32 %v786, %v906
      %v923 = vadd.f32 %v787, %v907
      %v924 = vadd.f32 %v788, %v908
      %v925 = vadd.f32 %v789, %v909
      %v926 = vadd.f32 %v790, %v910
      %v927 = vadd.f32 %v791, %v911
      %v928 = vadd.f32 %v792, %v912
      %v929 = vlaneseq
      %v930 = vshrl.u32 %v929, 7
      %v931 = vsub.s32 3, %v930
      %v932 = vrot.slane %v304, %v931
      %v933 = vmul.f32 %v401, %v932
      %v934 = vmul.f32 %v402, %v932
      %v935 = vmul.f32 %v403, %v932
      %v936 = vmul.f32 %v404, %v932
      %v937 = vmul.f32 %v405, %v932
      %v938 = vmul.f32 %v406, %v932
      %v939 = vmul.f32 %v407, %v932
      %v940 = vmul.f32 %v408, %v932
      %v941 = vmul.f32 %v409, %v932
      %v942 = vmul.f32 %v410, %v932
      %v943 = vmul.f32 %v411, %v932
      %v944 = vmul.f32 %v412, %v932
      %v945 = vmul.f32 %v413, %v932
      %v946 = vmul.f32 %v414, %v932
      %v947 = vmul.f32 %v415, %v932
      %v948 = vmul.f32 %v416, %v932
      %v949 = vadd.f32 %v933, %v436
      %v950 = vadd.f32 %v934, %v441
      %v951 = vadd.f32 %v935, %v446
      %v952 = vadd.f32 %v936, %v451
      %v953 = vadd.f32 %v937, %v456
      %v954 = vadd.f32 %v938, %v461
      %v955 = vadd.f32 %v939, %v466
      %v956 = vadd.f32 %v940, %v471
      %v957 = vadd.f32 %v941, %v476
      %v958 = vadd.f32 %v942, %v481
      %v959 = vadd.f32 %v943, %v486
      %v960 = vadd.f32 %v944, %v491
      %v961 = vadd.f32 %v945, %v496
      %v962 = vadd.f32 %v946, %v501
      %v963 = vadd.f32 %v947, %v506
      %v964 = vadd.f32 %v948, %v511
      %v965 = vmax.f32 %v949, 0.0
      %v966 = vmax.f32 %v950, 0.0
      %v967 = vmax.f32 %v951, 0.0
      %v968 = vmax.f32 %v952, 0.0
      %v969 = vmax.f32 %v953, 0.0
      %v970 = vmax.f32 %v954, 0.0
      %v971 = vmax.f32 %v955, 0.0
      %v972 = vmax.f32 %v956, 0.0
      %v973 = vmax.f32 %v957, 0.0
      %v974 = vmax.f32 %v958, 0.0
      %v975 = vmax.f32 %v959, 0.0
      %v976 = vmax.f32 %v960, 0.0
      %v977 = vmax.f32 %v961, 0.0
      %v978 = vmax.f32 %v962, 0.0
      %v979 = vmax.f32 %v963, 0.0
      %v980 = vmax.f32 %v964, 0.0
      %v981 = vsel %vm572, %v965, 0.0
      %982 = vadd.xlane.f32.xlu0 %v981
      %v983 = vpop.xlane.xlu0 %982
      %v984 = vsel %vm572, %v966, 0.0
      %985 = vadd.xlane.f32.xlu0 %v984
      %v986 = vpop.xlane.xlu0 %985
      %v987 = vsel %vm572, %v967, 0.0
      %988 = vadd.xlane.f32.xlu0 %v987
      %v989 = vpop.xlane.xlu0 %988
      %v990 = vsel %vm572, %v968, 0.0
      %991 = vadd.xlane.f32.xlu0 %v990
      %v992 = vpop.xlane.xlu0 %991
      %v993 = vsel %vm572, %v969, 0.0
      %994 = vadd.xlane.f32.xlu0 %v993
      %v995 = vpop.xlane.xlu0 %994
      %v996 = vsel %vm572, %v970, 0.0
      %997 = vadd.xlane.f32.xlu0 %v996
      %v998 = vpop.xlane.xlu0 %997
      %v999 = vsel %vm572, %v971, 0.0
      %1000 = vadd.xlane.f32.xlu0 %v999
      %v1001 = vpop.xlane.xlu0 %1000
      %v1002 = vsel %vm572, %v972, 0.0
      %1003 = vadd.xlane.f32.xlu0 %v1002
      %v1004 = vpop.xlane.xlu0 %1003
      %v1005 = vsel %vm572, %v973, 0.0
      %1006 = vadd.xlane.f32.xlu0 %v1005
      %v1007 = vpop.xlane.xlu0 %1006
      %v1008 = vsel %vm572, %v974, 0.0
      %1009 = vadd.xlane.f32.xlu0 %v1008
      %v1010 = vpop.xlane.xlu0 %1009
      %v1011 = vsel %vm572, %v975, 0.0
      %1012 = vadd.xlane.f32.xlu0 %v1011
      %v1013 = vpop.xlane.xlu0 %1012
      %v1014 = vsel %vm572, %v976, 0.0
      %1015 = vadd.xlane.f32.xlu0 %v1014
      %v1016 = vpop.xlane.xlu0 %1015
      %v1017 = vsel %vm572, %v977, 0.0
      %1018 = vadd.xlane.f32.xlu0 %v1017
      %v1019 = vpop.xlane.xlu0 %1018
      %v1020 = vsel %vm572, %v978, 0.0
      %1021 = vadd.xlane.f32.xlu0 %v1020
      %v1022 = vpop.xlane.xlu0 %1021
      %v1023 = vsel %vm572, %v979, 0.0
      %1024 = vadd.xlane.f32.xlu0 %v1023
      %v1025 = vpop.xlane.xlu0 %1024
      %v1026 = vsel %vm572, %v980, 0.0
      %1027 = vadd.xlane.f32.xlu0 %v1026
      %v1028 = vpop.xlane.xlu0 %1027
      %v1029 = vlaneseq
      %v1030 = vshrl.u32 %v1029, 7
      %v1031 = vsub.s32 3, %v1030
      %v1032 = vrot.slane %v519, %v1031
      %v1033 = vmul.f32 %v983, %v1032
      %v1034 = vmul.f32 %v986, %v1032
      %v1035 = vmul.f32 %v989, %v1032
      %v1036 = vmul.f32 %v992, %v1032
      %v1037 = vmul.f32 %v995, %v1032
      %v1038 = vmul.f32 %v998, %v1032
      %v1039 = vmul.f32 %v1001, %v1032
      %v1040 = vmul.f32 %v1004, %v1032
      %v1041 = vmul.f32 %v1007, %v1032
      %v1042 = vmul.f32 %v1010, %v1032
      %v1043 = vmul.f32 %v1013, %v1032
      %v1044 = vmul.f32 %v1016, %v1032
      %v1045 = vmul.f32 %v1019, %v1032
      %v1046 = vmul.f32 %v1022, %v1032
      %v1047 = vmul.f32 %v1025, %v1032
      %v1048 = vmul.f32 %v1028, %v1032
      %v1049 = vadd.f32 %v913, %v1033
      %v1050 = vadd.f32 %v914, %v1034
      %v1051 = vadd.f32 %v915, %v1035
      %v1052 = vadd.f32 %v916, %v1036
      %v1053 = vadd.f32 %v917, %v1037
      %v1054 = vadd.f32 %v918, %v1038
      %v1055 = vadd.f32 %v919, %v1039
      %v1056 = vadd.f32 %v920, %v1040
      %v1057 = vadd.f32 %v921, %v1041
      %v1058 = vadd.f32 %v922, %v1042
      %v1059 = vadd.f32 %v923, %v1043
      %v1060 = vadd.f32 %v924, %v1044
      %v1061 = vadd.f32 %v925, %v1045
      %v1062 = vadd.f32 %v926, %v1046
      %v1063 = vadd.f32 %v927, %v1047
      %v1064 = vadd.f32 %v928, %v1048
      %v1065 = vlaneseq
      %v1066 = vshrl.u32 %v1065, 7
      %v1067 = vsub.s32 4, %v1066
      %v1068 = vrot.slane %v304, %v1067
      %v1069 = vmul.f32 %v401, %v1068
      %v1070 = vmul.f32 %v402, %v1068
      %v1071 = vmul.f32 %v403, %v1068
      %v1072 = vmul.f32 %v404, %v1068
      %v1073 = vmul.f32 %v405, %v1068
      %v1074 = vmul.f32 %v406, %v1068
      %v1075 = vmul.f32 %v407, %v1068
      %v1076 = vmul.f32 %v408, %v1068
      %v1077 = vmul.f32 %v409, %v1068
      %v1078 = vmul.f32 %v410, %v1068
      %v1079 = vmul.f32 %v411, %v1068
      %v1080 = vmul.f32 %v412, %v1068
      %v1081 = vmul.f32 %v413, %v1068
      %v1082 = vmul.f32 %v414, %v1068
      %v1083 = vmul.f32 %v415, %v1068
      %v1084 = vmul.f32 %v416, %v1068
      %v1085 = vadd.f32 %v1069, %v436
      %v1086 = vadd.f32 %v1070, %v441
      %v1087 = vadd.f32 %v1071, %v446
      %v1088 = vadd.f32 %v1072, %v451
      %v1089 = vadd.f32 %v1073, %v456
      %v1090 = vadd.f32 %v1074, %v461
      %v1091 = vadd.f32 %v1075, %v466
      %v1092 = vadd.f32 %v1076, %v471
      %v1093 = vadd.f32 %v1077, %v476
      %v1094 = vadd.f32 %v1078, %v481
      %v1095 = vadd.f32 %v1079, %v486
      %v1096 = vadd.f32 %v1080, %v491
      %v1097 = vadd.f32 %v1081, %v496
      %v1098 = vadd.f32 %v1082, %v501
      %v1099 = vadd.f32 %v1083, %v506
      %v1100 = vadd.f32 %v1084, %v511
      %v1101 = vmax.f32 %v1085, 0.0
      %v1102 = vmax.f32 %v1086, 0.0
      %v1103 = vmax.f32 %v1087, 0.0
      %v1104 = vmax.f32 %v1088, 0.0
      %v1105 = vmax.f32 %v1089, 0.0
      %v1106 = vmax.f32 %v1090, 0.0
      %v1107 = vmax.f32 %v1091, 0.0
      %v1108 = vmax.f32 %v1092, 0.0
      %v1109 = vmax.f32 %v1093, 0.0
      %v1110 = vmax.f32 %v1094, 0.0
      %v1111 = vmax.f32 %v1095, 0.0
      %v1112 = vmax.f32 %v1096, 0.0
      %v1113 = vmax.f32 %v1097, 0.0
      %v1114 = vmax.f32 %v1098, 0.0
      %v1115 = vmax.f32 %v1099, 0.0
      %v1116 = vmax.f32 %v1100, 0.0
      %v1117 = vsel %vm572, %v1101, 0.0
      %1118 = vadd.xlane.f32.xlu0 %v1117
      %v1119 = vpop.xlane.xlu0 %1118
      %v1120 = vsel %vm572, %v1102, 0.0
      %1121 = vadd.xlane.f32.xlu0 %v1120
      %v1122 = vpop.xlane.xlu0 %1121
      %v1123 = vsel %vm572, %v1103, 0.0
      %1124 = vadd.xlane.f32.xlu0 %v1123
      %v1125 = vpop.xlane.xlu0 %1124
      %v1126 = vsel %vm572, %v1104, 0.0
      %1127 = vadd.xlane.f32.xlu0 %v1126
      %v1128 = vpop.xlane.xlu0 %1127
      %v1129 = vsel %vm572, %v1105, 0.0
      %1130 = vadd.xlane.f32.xlu0 %v1129
      %v1131 = vpop.xlane.xlu0 %1130
      %v1132 = vsel %vm572, %v1106, 0.0
      %1133 = vadd.xlane.f32.xlu0 %v1132
      %v1134 = vpop.xlane.xlu0 %1133
      %v1135 = vsel %vm572, %v1107, 0.0
      %1136 = vadd.xlane.f32.xlu0 %v1135
      %v1137 = vpop.xlane.xlu0 %1136
      %v1138 = vsel %vm572, %v1108, 0.0
      %1139 = vadd.xlane.f32.xlu0 %v1138
      %v1140 = vpop.xlane.xlu0 %1139
      %v1141 = vsel %vm572, %v1109, 0.0
      %1142 = vadd.xlane.f32.xlu0 %v1141
      %v1143 = vpop.xlane.xlu0 %1142
      %v1144 = vsel %vm572, %v1110, 0.0
      %1145 = vadd.xlane.f32.xlu0 %v1144
      %v1146 = vpop.xlane.xlu0 %1145
      %v1147 = vsel %vm572, %v1111, 0.0
      %1148 = vadd.xlane.f32.xlu0 %v1147
      %v1149 = vpop.xlane.xlu0 %1148
      %v1150 = vsel %vm572, %v1112, 0.0
      %1151 = vadd.xlane.f32.xlu0 %v1150
      %v1152 = vpop.xlane.xlu0 %1151
      %v1153 = vsel %vm572, %v1113, 0.0
      %1154 = vadd.xlane.f32.xlu0 %v1153
      %v1155 = vpop.xlane.xlu0 %1154
      %v1156 = vsel %vm572, %v1114, 0.0
      %1157 = vadd.xlane.f32.xlu0 %v1156
      %v1158 = vpop.xlane.xlu0 %1157
      %v1159 = vsel %vm572, %v1115, 0.0
      %1160 = vadd.xlane.f32.xlu0 %v1159
      %v1161 = vpop.xlane.xlu0 %1160
      %v1162 = vsel %vm572, %v1116, 0.0
      %1163 = vadd.xlane.f32.xlu0 %v1162
      %v1164 = vpop.xlane.xlu0 %1163
      %v1165 = vlaneseq
      %v1166 = vshrl.u32 %v1165, 7
      %v1167 = vsub.s32 4, %v1166
      %v1168 = vrot.slane %v519, %v1167
      %v1169 = vmul.f32 %v1119, %v1168
      %v1170 = vmul.f32 %v1122, %v1168
      %v1171 = vmul.f32 %v1125, %v1168
      %v1172 = vmul.f32 %v1128, %v1168
      %v1173 = vmul.f32 %v1131, %v1168
      %v1174 = vmul.f32 %v1134, %v1168
      %v1175 = vmul.f32 %v1137, %v1168
      %v1176 = vmul.f32 %v1140, %v1168
      %v1177 = vmul.f32 %v1143, %v1168
      %v1178 = vmul.f32 %v1146, %v1168
      %v1179 = vmul.f32 %v1149, %v1168
      %v1180 = vmul.f32 %v1152, %v1168
      %v1181 = vmul.f32 %v1155, %v1168
      %v1182 = vmul.f32 %v1158, %v1168
      %v1183 = vmul.f32 %v1161, %v1168
      %v1184 = vmul.f32 %v1164, %v1168
      %v1185 = vadd.f32 %v1049, %v1169
      %v1186 = vadd.f32 %v1050, %v1170
      %v1187 = vadd.f32 %v1051, %v1171
      %v1188 = vadd.f32 %v1052, %v1172
      %v1189 = vadd.f32 %v1053, %v1173
      %v1190 = vadd.f32 %v1054, %v1174
      %v1191 = vadd.f32 %v1055, %v1175
      %v1192 = vadd.f32 %v1056, %v1176
      %v1193 = vadd.f32 %v1057, %v1177
      %v1194 = vadd.f32 %v1058, %v1178
      %v1195 = vadd.f32 %v1059, %v1179
      %v1196 = vadd.f32 %v1060, %v1180
      %v1197 = vadd.f32 %v1061, %v1181
      %v1198 = vadd.f32 %v1062, %v1182
      %v1199 = vadd.f32 %v1063, %v1183
      %v1200 = vadd.f32 %v1064, %v1184
      %v1201 = vlaneseq
      %v1202 = vshrl.u32 %v1201, 7
      %v1203 = vsub.s32 5, %v1202
      %v1204 = vrot.slane %v304, %v1203
      %v1205 = vmul.f32 %v401, %v1204
      %v1206 = vmul.f32 %v402, %v1204
      %v1207 = vmul.f32 %v403, %v1204
      %v1208 = vmul.f32 %v404, %v1204
      %v1209 = vmul.f32 %v405, %v1204
      %v1210 = vmul.f32 %v406, %v1204
      %v1211 = vmul.f32 %v407, %v1204
      %v1212 = vmul.f32 %v408, %v1204
      %v1213 = vmul.f32 %v409, %v1204
      %v1214 = vmul.f32 %v410, %v1204
      %v1215 = vmul.f32 %v411, %v1204
      %v1216 = vmul.f32 %v412, %v1204
      %v1217 = vmul.f32 %v413, %v1204
      %v1218 = vmul.f32 %v414, %v1204
      %v1219 = vmul.f32 %v415, %v1204
      %v1220 = vmul.f32 %v416, %v1204
      %v1221 = vadd.f32 %v1205, %v436
      %v1222 = vadd.f32 %v1206, %v441
      %v1223 = vadd.f32 %v1207, %v446
      %v1224 = vadd.f32 %v1208, %v451
      %v1225 = vadd.f32 %v1209, %v456
      %v1226 = vadd.f32 %v1210, %v461
      %v1227 = vadd.f32 %v1211, %v466
      %v1228 = vadd.f32 %v1212, %v471
      %v1229 = vadd.f32 %v1213, %v476
      %v1230 = vadd.f32 %v1214, %v481
      %v1231 = vadd.f32 %v1215, %v486
      %v1232 = vadd.f32 %v1216, %v491
      %v1233 = vadd.f32 %v1217, %v496
      %v1234 = vadd.f32 %v1218, %v501
      %v1235 = vadd.f32 %v1219, %v506
      %v1236 = vadd.f32 %v1220, %v511
      %v1237 = vmax.f32 %v1221, 0.0
      %v1238 = vmax.f32 %v1222, 0.0
      %v1239 = vmax.f32 %v1223, 0.0
      %v1240 = vmax.f32 %v1224, 0.0
      %v1241 = vmax.f32 %v1225, 0.0
      %v1242 = vmax.f32 %v1226, 0.0
      %v1243 = vmax.f32 %v1227, 0.0
      %v1244 = vmax.f32 %v1228, 0.0
      %v1245 = vmax.f32 %v1229, 0.0
      %v1246 = vmax.f32 %v1230, 0.0
      %v1247 = vmax.f32 %v1231, 0.0
      %v1248 = vmax.f32 %v1232, 0.0
      %v1249 = vmax.f32 %v1233, 0.0
      %v1250 = vmax.f32 %v1234, 0.0
      %v1251 = vmax.f32 %v1235, 0.0
      %v1252 = vmax.f32 %v1236, 0.0
      %v1253 = vsel %vm572, %v1237, 0.0
      %1254 = vadd.xlane.f32.xlu0 %v1253
      %v1255 = vpop.xlane.xlu0 %1254
      %v1256 = vsel %vm572, %v1238, 0.0
      %1257 = vadd.xlane.f32.xlu0 %v1256
      %v1258 = vpop.xlane.xlu0 %1257
      %v1259 = vsel %vm572, %v1239, 0.0
      %1260 = vadd.xlane.f32.xlu0 %v1259
      %v1261 = vpop.xlane.xlu0 %1260
      %v1262 = vsel %vm572, %v1240, 0.0
      %1263 = vadd.xlane.f32.xlu0 %v1262
      %v1264 = vpop.xlane.xlu0 %1263
      %v1265 = vsel %vm572, %v1241, 0.0
      %1266 = vadd.xlane.f32.xlu0 %v1265
      %v1267 = vpop.xlane.xlu0 %1266
      %v1268 = vsel %vm572, %v1242, 0.0
      %1269 = vadd.xlane.f32.xlu0 %v1268
      %v1270 = vpop.xlane.xlu0 %1269
      %v1271 = vsel %vm572, %v1243, 0.0
      %1272 = vadd.xlane.f32.xlu0 %v1271
      %v1273 = vpop.xlane.xlu0 %1272
      %v1274 = vsel %vm572, %v1244, 0.0
      %1275 = vadd.xlane.f32.xlu0 %v1274
      %v1276 = vpop.xlane.xlu0 %1275
      %v1277 = vsel %vm572, %v1245, 0.0
      %1278 = vadd.xlane.f32.xlu0 %v1277
      %v1279 = vpop.xlane.xlu0 %1278
      %v1280 = vsel %vm572, %v1246, 0.0
      %1281 = vadd.xlane.f32.xlu0 %v1280
      %v1282 = vpop.xlane.xlu0 %1281
      %v1283 = vsel %vm572, %v1247, 0.0
      %1284 = vadd.xlane.f32.xlu0 %v1283
      %v1285 = vpop.xlane.xlu0 %1284
      %v1286 = vsel %vm572, %v1248, 0.0
      %1287 = vadd.xlane.f32.xlu0 %v1286
      %v1288 = vpop.xlane.xlu0 %1287
      %v1289 = vsel %vm572, %v1249, 0.0
      %1290 = vadd.xlane.f32.xlu0 %v1289
      %v1291 = vpop.xlane.xlu0 %1290
      %v1292 = vsel %vm572, %v1250, 0.0
      %1293 = vadd.xlane.f32.xlu0 %v1292
      %v1294 = vpop.xlane.xlu0 %1293
      %v1295 = vsel %vm572, %v1251, 0.0
      %1296 = vadd.xlane.f32.xlu0 %v1295
      %v1297 = vpop.xlane.xlu0 %1296
      %v1298 = vsel %vm572, %v1252, 0.0
      %1299 = vadd.xlane.f32.xlu0 %v1298
      %v1300 = vpop.xlane.xlu0 %1299
      %v1301 = vlaneseq
      %v1302 = vshrl.u32 %v1301, 7
      %v1303 = vsub.s32 5, %v1302
      %v1304 = vrot.slane %v519, %v1303
      %v1305 = vmul.f32 %v1255, %v1304
      %v1306 = vmul.f32 %v1258, %v1304
      %v1307 = vmul.f32 %v1261, %v1304
      %v1308 = vmul.f32 %v1264, %v1304
      %v1309 = vmul.f32 %v1267, %v1304
      %v1310 = vmul.f32 %v1270, %v1304
      %v1311 = vmul.f32 %v1273, %v1304
      %v1312 = vmul.f32 %v1276, %v1304
      %v1313 = vmul.f32 %v1279, %v1304
      %v1314 = vmul.f32 %v1282, %v1304
      %v1315 = vmul.f32 %v1285, %v1304
      %v1316 = vmul.f32 %v1288, %v1304
      %v1317 = vmul.f32 %v1291, %v1304
      %v1318 = vmul.f32 %v1294, %v1304
      %v1319 = vmul.f32 %v1297, %v1304
      %v1320 = vmul.f32 %v1300, %v1304
      %v1321 = vadd.f32 %v1185, %v1305
      %v1322 = vadd.f32 %v1186, %v1306
      %v1323 = vadd.f32 %v1187, %v1307
      %v1324 = vadd.f32 %v1188, %v1308
      %v1325 = vadd.f32 %v1189, %v1309
      %v1326 = vadd.f32 %v1190, %v1310
      %v1327 = vadd.f32 %v1191, %v1311
      %v1328 = vadd.f32 %v1192, %v1312
      %v1329 = vadd.f32 %v1193, %v1313
      %v1330 = vadd.f32 %v1194, %v1314
      %v1331 = vadd.f32 %v1195, %v1315
      %v1332 = vadd.f32 %v1196, %v1316
      %v1333 = vadd.f32 %v1197, %v1317
      %v1334 = vadd.f32 %v1198, %v1318
      %v1335 = vadd.f32 %v1199, %v1319
      %v1336 = vadd.f32 %v1200, %v1320
      %v1337 = vmul.f32 %v1321, 0.041666668
      %v1338 = vmul.f32 %v1322, 0.041666668
      %v1339 = vmul.f32 %v1323, 0.041666668
      %v1340 = vmul.f32 %v1324, 0.041666668
      %v1341 = vmul.f32 %v1325, 0.041666668
      %v1342 = vmul.f32 %v1326, 0.041666668
      %v1343 = vmul.f32 %v1327, 0.041666668
      %v1344 = vmul.f32 %v1328, 0.041666668
      %v1345 = vmul.f32 %v1329, 0.041666668
      %v1346 = vmul.f32 %v1330, 0.041666668
      %v1347 = vmul.f32 %v1331, 0.041666668
      %v1348 = vmul.f32 %v1332, 0.041666668
      %v1349 = vmul.f32 %v1333, 0.041666668
      %v1350 = vmul.f32 %v1334, 0.041666668
      %v1351 = vmul.f32 %v1335, 0.041666668
      %v1352 = vmul.f32 %v1336, 0.041666668
      %vm1353 = vcmask 48128
      %1354 = vst.msk [vmem:[%s197] sm:$0xff] %vm1353, %v1337
      %1355 = vst.msk [vmem:[%s197 + $0x8] sm:$0xff] %vm1353, %v1338
      %1356 = vst.msk [vmem:[%s197 + $0x10] sm:$0xff] %vm1353, %v1339
      %1357 = vst.msk [vmem:[%s197 + $0x18] sm:$0xff] %vm1353, %v1340
      %1358 = vst.msk [vmem:[%s197 + $0x20] sm:$0xff] %vm1353, %v1341
      %1359 = vst.msk [vmem:[%s197 + $0x28] sm:$0xff] %vm1353, %v1342
      %1360 = vst.msk [vmem:[%s197 + $0x30] sm:$0xff] %vm1353, %v1343
      %1361 = vst.msk [vmem:[%s197 + $0x38] sm:$0xff] %vm1353, %v1344
      %1362 = vst.msk [vmem:[%s197 + $0x40] sm:$0xff] %vm1353, %v1345
      %1363 = vst.msk [vmem:[%s197 + $0x48] sm:$0xff] %vm1353, %v1346
      %1364 = vst.msk [vmem:[%s197 + $0x50] sm:$0xff] %vm1353, %v1347
      %1365 = vst.msk [vmem:[%s197 + $0x58] sm:$0xff] %vm1353, %v1348
      %1366 = vst.msk [vmem:[%s197 + $0x60] sm:$0xff] %vm1353, %v1349
      %1367 = vst.msk [vmem:[%s197 + $0x68] sm:$0xff] %vm1353, %v1350
      %1368 = vst.msk [vmem:[%s197 + $0x70] sm:$0xff] %vm1353, %v1351
      %1369 = vst.msk [vmem:[%s197 + $0x78] sm:$0xff] %vm1353, %v1352
      %p1370 = scmp.lt.s32.totalorder %s15, 1
      %s1371 = scalar_select %p1370, %s15, 1
      %s1372 = smul.addr %s1371, 16
      %s1373 = smul.addr %s1372, 8
      %s1374 = scalar_lea.vmem %s4, %s1373
      // Predicated region
      $region37: #{tpu_custom_call.1} parent=35 // pred_check
        %p1375 = pneg %p122
      $region38: #{tpu_custom_call.1} parent=35 // pred_check_branch
        %1377 = sbr.rel (%p1375) target = $region40
      $region39: #{tpu_custom_call.1} parent=35 // pred_region
        _
      $region40: #{tpu_custom_call.1} parent=35 // pred_fallthru
        _
    $region36: #{tpu_custom_call.1} parent=5 // pred_fallthru
      _
    %p1378 = scmp.le.s32.totalorder 2, %s10
    // Predicated region
    $region41: #{tpu_custom_call.1} parent=5 // pred_check
      %p1379 = pneg %p1378
    $region42: #{tpu_custom_call.1} parent=5 // pred_check_branch
      %1381 = sbr.rel (%p1379) target = $region44
    $region43: #{tpu_custom_call.1} parent=5 // pred_region
      %s1382 = ssub.s32 %s10, 2
      // Predicated region
      $region45: #{tpu_custom_call.1} parent=43 // pred_check
        %p1383 = pneg %p128
      $region46: #{tpu_custom_call.1} parent=43 // pred_check_branch
        %1385 = sbr.rel (%p1383) target = $region48
      $region47: #{tpu_custom_call.1} parent=43 // pred_region
        %p1386 = scmp.lt.s32.totalorder %s16, 1
        %s1387 = scalar_select %p1386, %s16, 1
        %s1388 = smul.addr %s1387, 16
        %s1389 = smul.addr %s1388, 8
        %s1390 = scalar_lea.vmem %s4, %s1389
      $region48: #{tpu_custom_call.1} parent=43 // pred_fallthru
        _
    $region44: #{tpu_custom_call.1} parent=5 // pred_fallthru
      _
  $region6: #{tpu_custom_call.1} parent=0 // loop_footer
    %s14 = sadd.s32 1, %s10
  $region7: #{tpu_custom_call.1} parent=0 // loop_footer_branch
    %9 = sbr.rel target = $region3
  $region8: #{tpu_custom_call.1} parent=0 // loop_exit
    _

</llo_original>
